<compile_context>
chip_gen: v7x
topology: tpu7x:2x2x1
jax: 0.10.0
libtpu: 0.0.40
codegen_flags: <defaults>
</compile_context>

<pallas_src>
import jax
import jax.numpy as jnp
from jax.experimental import pallas as pl
from jax.experimental.pallas import tpu as pltpu


def _round_up(x, m):
    return ((x + m - 1) // m) * m


def _vmem_budget_bytes():
    """Per-TensorCore VMEM budget for this kernel's blocks (generation aware)."""
    try:
        cap = int(pltpu.get_tpu_info().vmem_capacity_bytes)
    except Exception:
        cap = 64 * 1024 * 1024  # conservative fallback: v7x-sized VMEM (64 MiB / TC)
    # Use at most half the physical VMEM, capped at 48 MiB, leaving headroom for
    # compiler-internal scratch and double-buffering bookkeeping.
    return min(cap // 2, 48 * 1024 * 1024)


def _plan_nk(F, C):
    """N/K tile sizes and padded dims (independent of batch and of VMEM budget, so
    parameter prep and the forward pass always agree). Lane-dense multiples of 128;
    at realistic sizes these saturate to tn=512 / tk=2048 (256-aligned for the
    v6e/v7x 256x256 MXU)."""
    tn = min(512, _round_up(max(C, 1), 128))
    tk = min(2048, _round_up(max(F, 1), 128))
    Fp = _round_up(F, tk)
    Cp = _round_up(C, tn)
    return tn, tk, Fp, Cp


def _plan_m(B, tk, tn, vmem_budget):
    """M tile: grown toward B (fewer re-streams of the big (F, C) weight) within the
    VMEM budget; multiple of 16 for bf16 sublane packing."""

    def usage(tm):
        return (
            2 * tm * tk * 2      # x blocks, bf16, double-buffered
            + 2 * tk * tn * 2    # W^T blocks, bf16, double-buffered
            + 2 * tm * tn * 4    # f32 output blocks (accumulated in place)
            + 2 * tn * 4         # bias block
        )

    tm = min(1024, _round_up(max(B, 1), 16))
    if usage(tm) > vmem_budget:
        fit = (vmem_budget - 4 * tk * tn - 8 * tn) // (4 * tk + 8 * tn)
        tm = max(16, (int(fit) // 16) * 16)
    Bp = _round_up(B, tm)
    return tm, Bp, usage(tm)


def linear_kernel(x_ref, w_ref, b_ref, o_ref):
    k = pl.program_id(2)

    @pl.when(k == 0)
    def _init():
        o_ref[...] = jnp.zeros_like(o_ref)

    # Accumulate directly into the resident f32 output block (its BlockSpec index is
    # K-invariant, so it stays in VMEM across the whole K loop) — no scratch needed.
    o_ref[...] += jnp.dot(x_ref[...], w_ref[...], preferred_element_type=jnp.float32)

    @pl.when(k == pl.num_programs(2) - 1)
    def _finalize():
        o_ref[...] += b_ref[...]  # bias added once, in f32


def prepare_classifier_params(weight, bias):
    """One-time parameter prep (NOT in the forward hot path): transpose nn.Linear's
    (C, F) weight to (F, C), zero-pad to tile-divisible lane-dense shape, and cast to
    bf16 (the single biggest HBM-traffic lever). Bias stays f32."""
    C, F = weight.shape
    _, _, Fp, Cp = _plan_nk(F, C)
    w_t = jnp.zeros((Fp, Cp), jnp.bfloat16).at[:F, :C].set(weight.T.astype(jnp.bfloat16))
    b2 = jnp.zeros((1, Cp), jnp.float32).at[0, :C].set(bias.astype(jnp.float32))
    return w_t, b2


def classifier_forward(x, w_t_padded, b_padded, num_classes):
    """x: (B, F); w_t_padded: (Fp, Cp) bf16 pre-transposed+padded weight;
    b_padded: (1, Cp) f32; returns (B, num_classes) f32 logits."""
    B, F = x.shape
    C = num_classes
    tn, tk, Fp, Cp = _plan_nk(F, C)
    assert w_t_padded.shape == (Fp, Cp), "weight prepared with a different plan"
    assert w_t_padded.dtype == jnp.bfloat16
    assert b_padded.shape == (1, Cp)

    vmem_budget = _vmem_budget_bytes()
    tm, Bp, vmem_used = _plan_m(B, tk, tn, vmem_budget)

    # Single fused cast(+pad) pass over x: MXU operands are bf16, accumulation f32.
    if (Bp, Fp) != (B, F):
        xp = jnp.zeros((Bp, Fp), jnp.bfloat16).at[:B, :F].set(x.astype(jnp.bfloat16))
    else:
        xp = x.astype(jnp.bfloat16)

    grid = (Bp // tm, Cp // tn, Fp // tk)

    # Cost hint reflecting actual re-streaming (x re-read per N tile, W per M tile).
    flops = 2 * Bp * Fp * Cp
    bytes_accessed = (
        (Cp // tn) * Bp * Fp * 2      # x (bf16), streamed once per N tile
        + (Bp // tm) * Fp * Cp * 2    # W^T (bf16), streamed once per M tile
        + Bp * Cp * 4                 # f32 output
        + Cp * 4                      # bias
    )

    out_padded = pl.pallas_call(
        linear_kernel,
        out_shape=jax.ShapeDtypeStruct((Bp, Cp), jnp.float32),
        grid_spec=pltpu.PrefetchScalarGridSpec(
            num_scalar_prefetch=0,
            grid=grid,
            in_specs=[
                pl.BlockSpec((tm, tk), lambda i, j, k: (i, k)),   # x tile (bf16)
                pl.BlockSpec((tk, tn), lambda i, j, k: (k, j)),   # W^T tile (bf16)
                # Bias block index is K-invariant -> fetched once per (i, j) tile,
                # not per K step.
                pl.BlockSpec((1, tn), lambda i, j, k: (0, j)),
            ],
            out_specs=pl.BlockSpec((tm, tn), lambda i, j, k: (i, j)),
        ),
        compiler_params=pltpu.CompilerParams(
            # TODO(synk): on v7x use pltpu.CORE_PARALLEL on the M axis (2 TCs/chip).
            dimension_semantics=("parallel", "parallel", "arbitrary"),
            vmem_limit_bytes=int(vmem_used + (16 << 20)),
        ),
        cost_estimate=pl.CostEstimate(
            flops=flops, transcendentals=0, bytes_accessed=bytes_accessed
        ),
    )(xp, w_t_padded, b_padded)

    if (Bp, Cp) != (B, C):
        return out_padded[:B, :C]
    return out_padded


if __name__ == "__main__":
    # Small shapes consistent with Classifier(feature_dim, num_classes).
    batch, feature_dim, num_classes = 8, 32, 8

    key = jax.random.PRNGKey(0)
    kx, kw, kb = jax.random.split(key, 3)

    x = jax.random.normal(kx, (batch, feature_dim), dtype=jnp.float32)
    # Deterministic init mimicking nn.Linear's uniform(-1/sqrt(F), 1/sqrt(F)).
    bound = 1.0 / (feature_dim ** 0.5)
    weight = jax.random.uniform(kw, (num_classes, feature_dim),
                                minval=-bound, maxval=bound, dtype=jnp.float32)
    bias = jax.random.uniform(kb, (num_classes,),
                              minval=-bound, maxval=bound, dtype=jnp.float32)

    # One-time parameter prep (transpose + pad + bf16 cast) — outside the hot path.
    w_t_padded, b_padded = prepare_classifier_params(weight, bias)

    fwd = jax.jit(classifier_forward, static_argnames=("num_classes",))
    out = fwd(x, w_t_padded, b_padded, num_classes=num_classes)
    out = jax.block_until_ready(out)

    # Reference 1: same math with bf16-rounded operands and f32 accumulation
    # (matches the kernel's MXU numerics) — tight tolerance.
    xb = x.astype(jnp.bfloat16).astype(jnp.float32)
    wb = weight.astype(jnp.bfloat16).astype(jnp.float32)
    ref_bf16 = jnp.dot(xb, wb.T, precision=jax.lax.Precision.HIGHEST) + bias
    # Reference 2: full-f32 nn.Linear forward — loose tolerance (bf16 operands).
    ref_f32 = x @ weight.T + bias

    assert out.shape == (batch, num_classes)
    assert jnp.allclose(out, ref_bf16, atol=1e-3, rtol=1e-3)
    assert jnp.allclose(out, ref_f32, atol=5e-2, rtol=5e-2)

    print("KERNEL_OK")
</pallas_src>

<mosaic_0001>
module attributes {stable_mosaic.version = 11 : i64} {
  func.func @linear_kernel(%arg0: i32, %arg1: i32, %arg2: i32, %arg3: memref<16x128xbf16, #tpu.memory_space<vmem>>, %arg4: memref<128x128xbf16, #tpu.memory_space<vmem>>, %arg5: memref<1x128xf32, #tpu.memory_space<vmem>>, %arg6: memref<16x128xf32, #tpu.memory_space<vmem>>) attributes {dimension_semantics = [#tpu.dimension_semantics<parallel>, #tpu.dimension_semantics<parallel>, #tpu.dimension_semantics<arbitrary>], iteration_bounds = array<i64: 1, 1, 1>, scalar_prefetch = 0 : i64, scratch_operands = 0 : i64, tpu.core_type = #tpu.core_type<tc>, window_params = [{transform_indices = @transform_0, window_bounds = array<i64: 16, 128>}, {transform_indices = @transform_1, window_bounds = array<i64: 128, 128>}, {transform_indices = @transform_2, window_bounds = array<i64: 1, 128>}, {transform_indices = @transform_3, window_bounds = array<i64: 16, 128>}]} {
    %c0_i32 = arith.constant 0 : i32
    %0 = arith.cmpi eq, %arg2, %c0_i32 : i32
    %1 = arith.extui %0 : i1 to i32
    %c0_i32_0 = arith.constant 0 : i32
    %2 = arith.cmpi ne, %1, %c0_i32_0 : i32
    scf.if %2 {
      %cst_10 = arith.constant 0.000000e+00 : f32
      %12 = vector.broadcast %cst_10 : f32 to vector<16x128xf32>
      %c0_11 = arith.constant 0 : index
      %c0_12 = arith.constant 0 : index
      %13 = vector.load %arg6[%c0_11, %c0_12] : memref<16x128xf32, #tpu.memory_space<vmem>>, vector<16x128xf32>
      tpu.vector_store %arg6[%c0_11, %c0_12], %12 {strides = array<i32>} : memref<16x128xf32, #tpu.memory_space<vmem>>, vector<16x128xf32>,
    } else {
    }
    %c0 = arith.constant 0 : index
    %c0_1 = arith.constant 0 : index
    %3 = vector.load %arg6[%c0, %c0_1] : memref<16x128xf32, #tpu.memory_space<vmem>>, vector<16x128xf32>
    %c0_2 = arith.constant 0 : index
    %c0_3 = arith.constant 0 : index
    %4 = vector.load %arg3[%c0_2, %c0_3] : memref<16x128xbf16, #tpu.memory_space<vmem>>, vector<16x128xbf16>
    %c0_4 = arith.constant 0 : index
    %c0_5 = arith.constant 0 : index
    %5 = vector.load %arg4[%c0_4, %c0_5] : memref<128x128xbf16, #tpu.memory_space<vmem>>, vector<128x128xbf16>
    %cst = arith.constant dense<0.000000e+00> : vector<16x128xf32>
    %6 = tpu.matmul %4, %5, %cst {dimension_numbers = #tpu.dot_dimension_numbers<[1], [0], [0], [1], [0, 0, 1, 1], [], []>} : vector<16x128xbf16>, vector<128x128xbf16>, vector<16x128xf32> -> vector<16x128xf32>
    %7 = arith.addf %3, %6 : vector<16x128xf32>
    %c0_6 = arith.constant 0 : index
    %c0_7 = arith.constant 0 : index
    %8 = vector.load %arg6[%c0_6, %c0_7] : memref<16x128xf32, #tpu.memory_space<vmem>>, vector<16x128xf32>
    tpu.vector_store %arg6[%c0_6, %c0_7], %7 {strides = array<i32>} : memref<16x128xf32, #tpu.memory_space<vmem>>, vector<16x128xf32>,
    %c0_i32_8 = arith.constant 0 : i32
    %9 = arith.cmpi eq, %arg2, %c0_i32_8 : i32
    %10 = arith.extui %9 : i1 to i32
    %c0_i32_9 = arith.constant 0 : i32
    %11 = arith.cmpi ne, %10, %c0_i32_9 : i32
    scf.if %11 {
      %c0_10 = arith.constant 0 : index
      %c0_11 = arith.constant 0 : index
      %12 = vector.load %arg6[%c0_10, %c0_11] : memref<16x128xf32, #tpu.memory_space<vmem>>, vector<16x128xf32>
      %c0_12 = arith.constant 0 : index
      %c0_13 = arith.constant 0 : index
      %13 = vector.load %arg5[%c0_12, %c0_13] : memref<1x128xf32, #tpu.memory_space<vmem>>, vector<1x128xf32>
      %14 = vector.broadcast %13 : vector<1x128xf32> to vector<16x128xf32>
      %15 = arith.addf %12, %14 : vector<16x128xf32>
      %c0_14 = arith.constant 0 : index
      %c0_15 = arith.constant 0 : index
      %16 = vector.load %arg6[%c0_14, %c0_15] : memref<16x128xf32, #tpu.memory_space<vmem>>, vector<16x128xf32>
      tpu.vector_store %arg6[%c0_14, %c0_15], %15 {strides = array<i32>} : memref<16x128xf32, #tpu.memory_space<vmem>>, vector<16x128xf32>,
    } else {
    }
    return
  }
  func.func @transform_0(%arg0: i32, %arg1: i32, %arg2: i32) -> (i32, i32) {
    %c0_i32 = arith.constant 0 : i32
    return %arg0, %arg2 : i32, i32
  }
  func.func @transform_1(%arg0: i32, %arg1: i32, %arg2: i32) -> (i32, i32) {
    %c0_i32 = arith.constant 0 : i32
    return %arg2, %arg1 : i32, i32
  }
  func.func @transform_2(%arg0: i32, %arg1: i32, %arg2: i32) -> (i32, i32) {
    %c0_i32 = arith.constant 0 : i32
    %c0_i32_0 = arith.constant 0 : i32
    return %c0_i32, %arg1 : i32, i32
  }
  func.func @transform_3(%arg0: i32, %arg1: i32, %arg2: i32) -> (i32, i32) {
    %c0_i32 = arith.constant 0 : i32
    return %arg0, %arg1 : i32, i32
  }
}

</mosaic_0001>

<llo_original>
// kernel: classifier_forward.1
$region0: #{classifier_forward.1}
  #allocation0 [shape = 'u32[]', space=smem, size = 0x4, offset = 0x4, fixed_abs, tag = 'smem constant byte address 0x4 - core index']
  #allocation1 [shape = 'u32[144,128]{1,0:T(1,128)}', space=vmem, size = 0x12000, scoped, tag = 'internal scratch']
  %s0 = inlined_call_operand.vmem [shape: bf16[16,128], index: 0, kind: input, shape index: {}]
  %s1 = inlined_call_operand.hbm [shape: bf16[128,128], index: 1, kind: input, shape index: {}]
  %s2 = inlined_call_operand.vmem [shape: f32[1,128], index: 2, kind: input, shape index: {}]
  %s3 = inlined_call_operand.vmem [shape: f32[16,128], index: 3, kind: output, shape index: {}]
  %s4 = sld [smem:[#allocation0]]
  $region34: #{classifier_forward.1} parent=0
    _
  %s6 = ssub.s32 1, %s4
  %s7 = scalar_select 0, %s6, %s4
  $region1: #{classifier_forward.1} parent=0
    #allocation2 [shape = 'u8[32768]{0}', space=vmem, size = 0x8000, scoped, tag = 'input window, operand 1, single buffered']
    #allocation3 [shape = 's32[1]{0}', space=sflag, size = 0x4, scoped, tag = 'scoped memory for classifier_forward.1']
    %8 = vsyncpa [#allocation3], 0
    // Predicated region
    $region2: #{classifier_forward.1} parent=1 // pred_check
      _
    $region3: #{classifier_forward.1} parent=1 // pred_check_branch
      %10 = sbr.rel (0) target = $region5
    $region4: #{classifier_forward.1} parent=1 // pred_region
      _
    $region5: #{classifier_forward.1} parent=1 // pred_fallthru
      _
    // Predicated region
    $region6: #{classifier_forward.1} parent=1 // pred_check
      _
    $region7: #{classifier_forward.1} parent=1 // pred_check_branch
      %12 = sbr.rel (0) target = $region9
    $region8: #{classifier_forward.1} parent=1 // pred_region
      %s14 = ssub.s32 1024, 1024
      %15 = vsyncadd [#allocation3], %s14
      %s16 = sshll.u32 [#allocation2], 4
      %s17 = int_to_ptr.vmem [resolvable:$true] %s16
      %22 = dma.hbm_to_vmem [thread:$0]  %s1, 1024, %s17, [#allocation3], 64, 64, 4
    $region9: #{classifier_forward.1} parent=1 // pred_fallthru
      _
    // Predicated region
    $region10: #{classifier_forward.1} parent=1 // pred_check
      _
    $region11: #{classifier_forward.1} parent=1 // pred_check_branch
      %24 = sbr.rel (0) target = $region13
    $region12: #{classifier_forward.1} parent=1 // pred_region
      _
    $region13: #{classifier_forward.1} parent=1 // pred_fallthru
      _
    // Predicated region
    $region14: #{classifier_forward.1} parent=1 // pred_check
      _
    $region15: #{classifier_forward.1} parent=1 // pred_check_branch
      %26 = sbr.rel (0) target = $region17
    $region16: #{classifier_forward.1} parent=1 // pred_region
      %27 = dma.done [#allocation3], 1024
    $region17: #{classifier_forward.1} parent=1 // pred_fallthru
      _
    %p29 = scmp.eq.s32.totalorder 0, 0
    // Predicated region
    $region18: #{classifier_forward.1} parent=1 // pred_check
      %p30 = pneg %p29
    $region19: #{classifier_forward.1} parent=1 // pred_check_branch
      %32 = sbr.rel (%p30) target = $region21
    $region20: #{classifier_forward.1} parent=1 // pred_region
      %33 = vst [vmem:[%s3] sm:$0xff] 0.0
      %34 = vst [vmem:[%s3 + $0x8] sm:$0xff] 0.0
    $region21: #{classifier_forward.1} parent=1 // pred_fallthru
      _
    %v35 = vld [vmem:[%s3] sm:$0xff]
    %v36 = vld [vmem:[%s3 + $0x8] sm:$0xff]
    %v37 = vld [vmem:[%s0] sm:$0xf]
    %v38 = vld [vmem:[%s0 + $0x4] sm:$0xf]
    %v39 = vld [vmem:[#allocation2] sm:$0xf]
    %v40 = vld [vmem:[#allocation2 + $0x4] sm:$0xf]
    %v41 = vld [vmem:[#allocation2 + $0x8] sm:$0xf]
    %v42 = vld [vmem:[#allocation2 + $0xc] sm:$0xf]
    %v43 = vld [vmem:[#allocation2 + $0x10] sm:$0xf]
    %v44 = vld [vmem:[#allocation2 + $0x14] sm:$0xf]
    %v45 = vld [vmem:[#allocation2 + $0x18] sm:$0xf]
    %v46 = vld [vmem:[#allocation2 + $0x1c] sm:$0xf]
    %v47 = vld [vmem:[#allocation2 + $0x20] sm:$0xf]
    %v48 = vld [vmem:[#allocation2 + $0x24] sm:$0xf]
    %v49 = vld [vmem:[#allocation2 + $0x28] sm:$0xf]
    %v50 = vld [vmem:[#allocation2 + $0x2c] sm:$0xf]
    %v51 = vld [vmem:[#allocation2 + $0x30] sm:$0xf]
    %v52 = vld [vmem:[#allocation2 + $0x34] sm:$0xf]
    %v53 = vld [vmem:[#allocation2 + $0x38] sm:$0xf]
    %v54 = vld [vmem:[#allocation2 + $0x3c] sm:$0xf]
    %v57 = vunpack.c.l.b16 %v37
    %v58 = vunpack.c.l.b16 %v38
    %v59 = vpack.c.b16 %v58, %v57
    %v77 = vunpack.c.l.b16 %v39
    %v78 = vunpack.c.l.b16 %v40
    %v79 = vunpack.c.l.b16 %v41
    %v80 = vunpack.c.l.b16 %v42
    %v81 = vunpack.c.l.b16 %v43
    %v82 = vunpack.c.l.b16 %v44
    %v83 = vunpack.c.l.b16 %v45
    %v84 = vunpack.c.l.b16 %v46
    %v85 = vunpack.c.l.b16 %v47
    %v86 = vunpack.c.l.b16 %v48
    %v87 = vunpack.c.l.b16 %v49
    %v88 = vunpack.c.l.b16 %v50
    %v89 = vunpack.c.l.b16 %v51
    %v90 = vunpack.c.l.b16 %v52
    %v91 = vunpack.c.l.b16 %v53
    %v92 = vunpack.c.l.b16 %v54
    %v93 = vpack.c.b16 %v78, %v77
    %v94 = vpack.c.b16 %v80, %v79
    %v95 = vpack.c.b16 %v82, %v81
    %v96 = vpack.c.b16 %v84, %v83
    %v97 = vpack.c.b16 %v86, %v85
    %v98 = vpack.c.b16 %v88, %v87
    %v99 = vpack.c.b16 %v90, %v89
    %v100 = vpack.c.b16 %v92, %v91
    %109 = vmatprep.subr.bf16.mxu0 0
    %110 = vmatpush1.bf16.msra.mxu0 %v93
    %111 = vmatprep.subr.bf16.mxu0 0
    %112 = vmatpush1.bf16.msra.mxu0 %v94
    %113 = vmatprep.subr.bf16.mxu0 0
    %114 = vmatpush1.bf16.msra.mxu0 %v95
    %115 = vmatprep.subr.bf16.mxu0 0
    %116 = vmatpush1.bf16.msra.mxu0 %v96
    %117 = vmatprep.subr.bf16.mxu0 0
    %118 = vmatpush1.bf16.msra.mxu0 %v97
    %119 = vmatprep.subr.bf16.mxu0 0
    %120 = vmatpush1.bf16.msra.mxu0 %v98
    %121 = vmatprep.subr.bf16.mxu0 0
    %122 = vmatpush1.bf16.msra.mxu0 %v99
    %123 = vmatprep.subr.bf16.mxu0 0
    %124 = vmatpush1.bf16.msra.mxu0 %v100
    %125 = vmatprep.subr.bf16.mxu0 0
    %126 = vmatpush1.bf16.msra.mxu0 0
    %127 = vmatprep.subr.bf16.mxu0 0
    %128 = vmatpush1.bf16.msra.mxu0 0
    %129 = vmatprep.subr.bf16.mxu0 0
    %130 = vmatpush1.bf16.msra.mxu0 0
    %131 = vmatprep.subr.bf16.mxu0 0
    %132 = vmatpush1.bf16.msra.mxu0 0
    %133 = vmatprep.subr.bf16.mxu0 0
    %134 = vmatpush1.bf16.msra.mxu0 0
    %135 = vmatprep.subr.bf16.mxu0 0
    %136 = vmatpush1.bf16.msra.mxu0 0
    %137 = vmatprep.subr.bf16.mxu0 0
    %138 = vmatpush1.bf16.msra.mxu0 0
    %139 = vmatprep.subr.bf16.mxu0 0
    %140 = vmatpush1.bf16.msra.mxu0 0
    %141 = vmatprep.mubr.bf16.mxu0 0
    %142 = vmatmul.mubr.bf16.gmra.mrb[0].mxu0 %v59
    %v143 = vpop.f32.mrb[0].mxu0
    %v144 = vadd.f32 0.0, %v143
    %v145 = vpop.f32.mrb[0].mxu0
    %v146 = vpop.f32.mrb[0].mxu0
    %v147 = vadd.f32 0.0, %v146
    %v148 = vpop.f32.mrb[0].mxu0
    %149 = vdwg.mxu0
    %v150 = vadd.f32 %v35, %v144
    %v151 = vadd.f32 %v36, %v147
    %152 = vst [vmem:[%s3] sm:$0xff] %v150
    %153 = vst [vmem:[%s3 + $0x8] sm:$0xff] %v151
    // Predicated region
    $region22: #{classifier_forward.1} parent=1 // pred_check
      %p154 = pneg %p29
    $region23: #{classifier_forward.1} parent=1 // pred_check_branch
      %156 = sbr.rel (%p154) target = $region25
    $region24: #{classifier_forward.1} parent=1 // pred_region
      %v157 = vld [vmem:[%s3] sm:$0xff]
      %v158 = vld [vmem:[%s3 + $0x8] sm:$0xff]
      %v159 = vld [vmem:[%s2] sm:$0x1]
      %v161 = vlaneseq
      %v162 = vshrl.u32 %v161, 7
      %v163 = vsub.s32 0, %v162
      %v164 = vrot.slane %v159, %v163
      %v166 = vadd.f32 %v157, %v164
      %v167 = vadd.f32 %v158, %v164
      %168 = vst [vmem:[%s3] sm:$0xff] %v166
      %169 = vst [vmem:[%s3 + $0x8] sm:$0xff] %v167
    $region25: #{classifier_forward.1} parent=1 // pred_fallthru
      _
    // Predicated region
    $region26: #{classifier_forward.1} parent=1 // pred_check
      _
    $region27: #{classifier_forward.1} parent=1 // pred_check_branch
      %171 = sbr.rel (0) target = $region29
    $region28: #{classifier_forward.1} parent=1 // pred_region
      _
    $region29: #{classifier_forward.1} parent=1 // pred_fallthru
      _
    // Predicated region
    $region30: #{classifier_forward.1} parent=1 // pred_check
      _
    $region31: #{classifier_forward.1} parent=1 // pred_check_branch
      %173 = sbr.rel (0) target = $region33
    $region32: #{classifier_forward.1} parent=1 // pred_region
      _
    $region33: #{classifier_forward.1} parent=1 // pred_fallthru
      _
    %174 = vsyncpa [#allocation3], 1

</llo_original>
